<compile_context>
chip_gen: v7x
topology: tpu7x:2x2x1
jax: 0.10.0
libtpu: 0.0.40
codegen_flags: <defaults>
</compile_context>

<pallas_src>
import math

import numpy as np
import jax
import jax.numpy as jnp
from jax.experimental import pallas as pl
from jax.experimental.pallas import tpu as pltpu


# ---------------------------------------------------------------------------
# Bin-weight construction (wrapper-side XLA work)
# ---------------------------------------------------------------------------
def _tent_cdf(u):
    """Antiderivative of the tent kernel max(0, 1 - |t|) evaluated at u."""
    u = jnp.clip(u, -1.0, 1.0)
    return jnp.where(u <= 0.0, 0.5 * (u + 1.0) ** 2, 1.0 - 0.5 * (1.0 - u) ** 2)


def _build_bin_weights(rois, valid, H, W, PH, PW, scale):
    """Fused, area-normalized PrRoIPool bin weights, shape (S, PH*PW, H*W).

    `rois` has shape (S, 5); rows with valid == False (group padding slots)
    get all-zero weights so the packed matmul rows contribute nothing.
    """
    rois = rois.astype(jnp.float32)
    x1 = rois[:, 1] * scale
    y1 = rois[:, 2] * scale
    x2 = rois[:, 3] * scale
    y2 = rois[:, 4] * scale
    roi_w = jnp.maximum(x2 - x1, 0.0)
    roi_h = jnp.maximum(y2 - y1, 0.0)
    bin_w = roi_w / PW
    bin_h = roi_h / PH

    # wy[s, ph, i] = integral over bin ph of tent(y - i), shape (S, PH, H)
    i_idx = jnp.arange(H, dtype=jnp.float32)
    ph_idx = jnp.arange(PH, dtype=jnp.float32)
    by1 = y1[:, None] + ph_idx[None, :] * bin_h[:, None]
    by2 = by1 + bin_h[:, None]
    wy = (_tent_cdf(by2[:, :, None] - i_idx[None, None, :])
          - _tent_cdf(by1[:, :, None] - i_idx[None, None, :]))

    # wx[s, pw, j] = integral over bin pw of tent(x - j), shape (S, PW, W)
    j_idx = jnp.arange(W, dtype=jnp.float32)
    pw_idx = jnp.arange(PW, dtype=jnp.float32)
    bx1 = x1[:, None] + pw_idx[None, :] * bin_w[:, None]
    bx2 = bx1 + bin_w[:, None]
    wx = (_tent_cdf(bx2[:, :, None] - j_idx[None, None, :])
          - _tent_cdf(bx1[:, :, None] - j_idx[None, None, :]))

    # Fold the 1/bin_area normalization (degenerate-ROI -> 0) and the group
    # padding mask into wy so the fused product is already normalized.
    bin_area = bin_w * bin_h
    inv_area = jnp.where(bin_area > 0.0,
                         1.0 / jnp.where(bin_area > 0.0, bin_area, 1.0),
                         0.0)
    inv_area = inv_area * valid.astype(jnp.float32)
    wy = wy * inv_area[:, None, None]

    # TODO(synk): for very large N*PH*PW*H*W, build this outer product inside
    # the kernel from the separable wy/wx factors (or chunk over slots) to
    # avoid materializing the fused weights in HBM.
    S = rois.shape[0]
    wbin = jnp.einsum('spi,sqj->spqij', wy, wx).reshape(S, PH * PW, H * W)
    return wbin


# ---------------------------------------------------------------------------
# MoE-style ROI grouping (static shapes, runtime batch indices)
# ---------------------------------------------------------------------------
def _group_rois_by_batch(batch_idx, B, G, NG):
    """Assign each ROI to a padded slot so every group of G slots shares a batch.

    Returns (src, valid, group_batch, slot_of):
      src         (NG*G,)  original ROI index feeding each slot (0 for padding)
      valid       (NG*G,)  slot carries a real ROI
      group_batch (NG,)    batch index of every group (scalar-prefetch array)
      slot_of     (N,)     slot holding original ROI i (for output un-gather)
    """
    N = batch_idx.shape[0]
    counts = jnp.bincount(batch_idx, length=B)
    batch_start = jnp.concatenate(
        [jnp.zeros((1,), counts.dtype), jnp.cumsum(counts)[:-1]])
    padded_counts = ((counts + G - 1) // G) * G
    padded_start = jnp.concatenate(
        [jnp.zeros((1,), counts.dtype), jnp.cumsum(padded_counts)[:-1]])

    order = jnp.argsort(batch_idx)                      # batch-sorted ROI ids
    sorted_b = batch_idx[order]
    rank = jnp.arange(N, dtype=counts.dtype) - batch_start[sorted_b]
    slot = (padded_start[sorted_b] + rank).astype(jnp.int32)

    src = jnp.zeros((NG * G,), jnp.int32).at[slot].set(order.astype(jnp.int32))
    valid = jnp.zeros((NG * G,), jnp.bool_).at[slot].set(True)
    group_batch = jnp.zeros((NG,), jnp.int32).at[slot // G].set(
        sorted_b.astype(jnp.int32))
    slot_of = jnp.zeros((N,), jnp.int32).at[order].set(slot)
    return src, valid, group_batch, slot_of


# ---------------------------------------------------------------------------
# VMEM budgeting
# ---------------------------------------------------------------------------
def _vmem_step_bytes(M, HW, CT, in_itemsize):
    wbin_b = 2 * M * HW * in_itemsize       # double-buffered fused weights
    feat_b = 2 * HW * CT * in_itemsize      # double-buffered feature slab
    out_b = 2 * M * CT * 4                  # double-buffered f32 output tile
    return wbin_b + feat_b + out_b


def _pick_channel_tile(Cpad, HW, M, in_itemsize):
    # Budget ALL double-buffered blocks against 32 MiB so the kernel fits
    # v7x's 64 MiB physical VMEM with headroom; vmem_limit_bytes is still set
    # explicitly (v5e's scoped default is only 16 MiB).
    budget = 32 << 20
    ct = 128
    cand = 128
    while cand <= Cpad:
        if Cpad % cand == 0 and _vmem_step_bytes(M, HW, cand, in_itemsize) <= budget:
            ct = cand
        cand += 128
    need = _vmem_step_bytes(M, HW, ct, in_itemsize)
    # TODO(synk): on v5e/v6e (128 MiB VMEM) a larger budget/CT is profitable;
    # for feature maps where even CT=128 overflows, add an inner "arbitrary"
    # grid axis over H*W with an f32 VMEM accumulator.
    vmem_limit = int(min(max(need + (4 << 20), 32 << 20), 100 << 20))
    return ct, vmem_limit


# ---------------------------------------------------------------------------
# Kernel: one lane/row-dense MXU matmul per (channel-tile, ROI-group) step
# ---------------------------------------------------------------------------
def _prroi_kernel(gb_ref, wbin_ref, feat_ref, out_ref):
    # (G*PH*PW, H*W) @ (H*W, CT) -> (G*PH*PW, CT): every bin of G same-image
    # ROIs for one channel tile, f32 accumulation on the MXU.
    out_ref[0] = jnp.dot(
        wbin_ref[0], feat_ref[0],
        preferred_element_type=jnp.float32).astype(out_ref.dtype)


def prroi_pool2d(features, rois, pooled_height, pooled_width, spatial_scale,
                 compute_dtype=jnp.bfloat16):
    features = jnp.asarray(features, jnp.float32)
    rois = jnp.asarray(rois, jnp.float32)
    B, C, H, W = features.shape
    N = rois.shape[0]
    PH, PW = int(pooled_height), int(pooled_width)
    scale = float(spatial_scale)
    HW = H * W
    itemsize = jnp.dtype(compute_dtype).itemsize

    # --- ROI grouping: pack G batch-matched ROIs into the matmul M dim ------
    G = max(1, min(-(-256 // (PH * PW)), N))        # target G*PH*PW >= 256
    while G > 1 and 2 * (G * PH * PW) * HW * itemsize > (12 << 20):
        G = max(1, G // 2)                          # keep the LHS block in budget
    NG = (N + B * (G - 1)) // G                     # static worst-case #groups
    M = G * PH * PW

    batch_idx = rois[:, 0].astype(jnp.int32)
    src, valid, group_batch, slot_of = _group_rois_by_batch(batch_idx, B, G, NG)

    # --- fused per-slot weights (matmul LHS) --------------------------------
    wbin = _build_bin_weights(rois[src], valid, H, W, PH, PW, scale)
    wbin = wbin.reshape(NG, M, HW).astype(compute_dtype)

    # --- lane-dense, channel-padded features (matmul RHS) -------------------
    Cpad = -(-C // 128) * 128                       # full 128-lane stores / MXU cols
    feat = features.transpose(0, 2, 3, 1).reshape(B, HW, C)
    if Cpad != C:
        feat = jnp.pad(feat, ((0, 0), (0, 0), (0, Cpad - C)))
    feat = feat.astype(compute_dtype)

    # --- channel tile + explicit VMEM limit ----------------------------------
    CT, vmem_limit = _pick_channel_tile(Cpad, HW, M, itemsize)
    grid = (Cpad // CT, NG)                         # channel tiles outer, groups inner

    grid_spec = pltpu.PrefetchScalarGridSpec(
        num_scalar_prefetch=1,                      # per-group batch index -> SMEM
        grid=grid,
        in_specs=[
            # fused per-group weights (changes every inner step, small & pipelined)
            pl.BlockSpec((1, M, HW), lambda c, g, gb: (g, 0, 0)),
            # feature slab gathered by the group's batch index; index is
            # unchanged across consecutive same-batch groups -> DMA elided.
            # TODO(synk): sweep pipeline_mode=pl.Buffered(3) here if the first
            # fetch after a batch change shows up as exposed DMA.
            pl.BlockSpec((1, HW, CT), lambda c, g, gb: (gb[g], 0, c)),
        ],
        out_specs=pl.BlockSpec((1, M, CT), lambda c, g, gb: (g, 0, c)),
    )

    out = pl.pallas_call(
        _prroi_kernel,
        out_shape=jax.ShapeDtypeStruct((NG, M, Cpad), jnp.float32),
        grid_spec=grid_spec,
        compiler_params=pltpu.CompilerParams(
            dimension_semantics=("parallel", "arbitrary"),
            vmem_limit_bytes=vmem_limit),
    )(group_batch, wbin, feat)

    # --- un-group and return the PyTorch (N, C, PH, PW) layout ---------------
    out = out.reshape(NG * G, PH, PW, Cpad)[slot_of, :, :, :C]
    return out.transpose(0, 3, 1, 2)


class PrRoIPool2D:
    def __init__(self, pooled_height, pooled_width, spatial_scale):
        self.pooled_height = int(pooled_height)
        self.pooled_width = int(pooled_width)
        self.spatial_scale = float(spatial_scale)

    def __call__(self, features, rois):
        return prroi_pool2d(features, rois, self.pooled_height,
                            self.pooled_width, self.spatial_scale)


# ----------------------------------------------------------------------------
# Pure-numpy reference following the original CUDA kernel cell-by-cell.
# ----------------------------------------------------------------------------
def _prroi_ref_numpy(features, rois, ph, pw, scale):
    features = np.asarray(features, np.float64)
    rois = np.asarray(rois, np.float64)
    B, C, H, W = features.shape
    N = rois.shape[0]
    out = np.zeros((N, C, ph, pw), np.float64)

    def getdata(d, h, w):
        if h < 0 or w < 0 or h >= H or w >= W:
            return 0.0
        return d[h, w]

    def mat_calc(d, s_h, s_w, e_h, e_w, y0, x0, y1, x1):
        s = 0.0
        alpha = x0 - s_w; beta = y0 - s_h; la = x1 - s_w; lb = y1 - s_h
        s += getdata(d, s_h, s_w) * (la - 0.5 * la * la - alpha + 0.5 * alpha * alpha) * \
             (lb - 0.5 * lb * lb - beta + 0.5 * beta * beta)
        alpha = e_w - x1; la = e_w - x0
        s += getdata(d, s_h, e_w) * (la - 0.5 * la * la - alpha + 0.5 * alpha * alpha) * \
             (lb - 0.5 * lb * lb - beta + 0.5 * beta * beta)
        alpha = x0 - s_w; beta = e_h - y1; la = x1 - s_w; lb = e_h - y0
        s += getdata(d, e_h, s_w) * (la - 0.5 * la * la - alpha + 0.5 * alpha * alpha) * \
             (lb - 0.5 * lb * lb - beta + 0.5 * beta * beta)
        alpha = e_w - x1; la = e_w - x0
        s += getdata(d, e_h, e_w) * (la - 0.5 * la * la - alpha + 0.5 * alpha * alpha) * \
             (lb - 0.5 * lb * lb - beta + 0.5 * beta * beta)
        return s

    for n in range(N):
        bidx = int(rois[n, 0])
        rsw = rois[n, 1] * scale; rsh = rois[n, 2] * scale
        rew = rois[n, 3] * scale; reh = rois[n, 4] * scale
        rw = max(rew - rsw, 0.0); rh = max(reh - rsh, 0.0)
        bh = rh / ph; bw = rw / pw
        for c in range(C):
            d = features[bidx, c]
            for i in range(ph):
                for j in range(pw):
                    bx1 = rsw + bw * j; by1 = rsh + bh * i
                    bx2 = bx1 + bw; by2 = by1 + bh
                    bin_size = max(0.0, bw * bh)
                    acc = 0.0
                    for bx in range(int(math.floor(bx1)), int(math.ceil(bx2))):
                        for by in range(int(math.floor(by1)), int(math.ceil(by2))):
                            acc += mat_calc(d, by, bx, by + 1, bx + 1,
                                            max(by1, float(by)), max(bx1, float(bx)),
                                            min(by2, float(by) + 1.0), min(bx2, float(bx) + 1.0))
                    out[n, c, i, j] = 0.0 if bin_size == 0.0 else acc / bin_size
    return out


if __name__ == "__main__":
    key = jax.random.PRNGKey(0)
    B, C, H, W = 2, 4, 16, 16
    pooled_h, pooled_w, spatial_scale = 4, 4, 0.5

    features = jax.random.normal(key, (B, C, H, W), dtype=jnp.float32)
    rois = jnp.array(
        [
            [0.0, 0.0, 0.0, 14.0, 14.0],    # ordinary roi in batch 0
            [1.0, 2.0, 3.0, 40.0, 34.0],    # roi extending past the feature map
            [0.0, 5.0, 5.0, 5.0, 9.0],      # degenerate (zero-width) roi -> zeros
        ],
        dtype=jnp.float32,
    )

    ref = _prroi_ref_numpy(np.asarray(features), np.asarray(rois),
                           pooled_h, pooled_w, spatial_scale)

    # f32 operand path: matches the CUDA-faithful reference tightly.
    out_f32 = jax.block_until_ready(
        prroi_pool2d(features, rois, pooled_h, pooled_w, spatial_scale,
                     compute_dtype=jnp.float32))
    np.testing.assert_allclose(np.asarray(out_f32), ref, rtol=1e-4, atol=1e-4)

    # bf16 operand path (default, MXU-native): relaxed tolerance.
    pool = PrRoIPool2D(pooled_h, pooled_w, spatial_scale)
    out_bf16 = jax.block_until_ready(pool(features, rois))
    np.testing.assert_allclose(np.asarray(out_bf16), ref, rtol=5e-2, atol=5e-2)

    print("KERNEL_OK")
</pallas_src>

<mosaic_0001>
module attributes {stable_mosaic.version = 11 : i64} {
  func.func @_prroi_kernel(%arg0: i32, %arg1: i32, %arg2: memref<2xi32, #tpu.memory_space<smem>>, %arg3: memref<1x48x256xf32, #tpu.memory_space<vmem>>, %arg4: memref<1x256x128xf32, #tpu.memory_space<vmem>>, %arg5: memref<1x48x128xf32, #tpu.memory_space<vmem>>) attributes {dimension_semantics = [#tpu.dimension_semantics<parallel>, #tpu.dimension_semantics<arbitrary>], iteration_bounds = array<i64: 1, 2>, scalar_prefetch = 1 : i64, scratch_operands = 0 : i64, tpu.core_type = #tpu.core_type<tc>, window_params = [{transform_indices = @transform_0, window_bounds = array<i64: 1, 48, 256>}, {transform_indices = @transform_1, window_bounds = array<i64: 1, 256, 128>}, {transform_indices = @transform_2, window_bounds = array<i64: 1, 48, 128>}]} {
    %c0 = arith.constant 0 : index
    %c0_0 = arith.constant 0 : index
    %c0_1 = arith.constant 0 : index
    %0 = vector.load %arg3[%c0, %c0_0, %c0_1] : memref<1x48x256xf32, #tpu.memory_space<vmem>>, vector<1x48x256xf32>
    %1 = vector.shape_cast %0 : vector<1x48x256xf32> to vector<48x256xf32>
    %c0_2 = arith.constant 0 : index
    %c0_3 = arith.constant 0 : index
    %c0_4 = arith.constant 0 : index
    %2 = vector.load %arg4[%c0_2, %c0_3, %c0_4] : memref<1x256x128xf32, #tpu.memory_space<vmem>>, vector<1x256x128xf32>
    %3 = vector.shape_cast %2 : vector<1x256x128xf32> to vector<256x128xf32>
    %cst = arith.constant dense<0.000000e+00> : vector<48x128xf32>
    %4 = tpu.matmul %1, %3, %cst {dimension_numbers = #tpu.dot_dimension_numbers<[1], [0], [0], [1], [0, 0, 1, 1], [], []>} : vector<48x256xf32>, vector<256x128xf32>, vector<48x128xf32> -> vector<48x128xf32>
    %c0_5 = arith.constant 0 : index
    %c0_6 = arith.constant 0 : index
    %c0_7 = arith.constant 0 : index
    %5 = vector.load %arg5[%c0_5, %c0_6, %c0_7] : memref<1x48x128xf32, #tpu.memory_space<vmem>>, vector<1x48x128xf32>
    %6 = vector.shape_cast %5 : vector<1x48x128xf32> to vector<48x128xf32>
    %7 = vector.shape_cast %4 : vector<48x128xf32> to vector<1x48x128xf32>
    tpu.vector_store %arg5[%c0_5, %c0_6, %c0_7], %7 {strides = array<i32>} : memref<1x48x128xf32, #tpu.memory_space<vmem>>, vector<1x48x128xf32>,
    return
  }
  func.func @transform_0(%arg0: i32, %arg1: i32, %arg2: memref<2xi32, #tpu.memory_space<smem>>) -> (i32, i32, i32) {
    %c0_i32 = arith.constant 0 : i32
    %c0_i32_0 = arith.constant 0 : i32
    %c0_i32_1 = arith.constant 0 : i32
    return %arg1, %c0_i32, %c0_i32_0 : i32, i32, i32
  }
  func.func @transform_1(%arg0: i32, %arg1: i32, %arg2: memref<2xi32, #tpu.memory_space<smem>>) -> (i32, i32, i32) {
    %0 = arith.index_cast %arg1 : i32 to index
    %1 = memref.load %arg2[%0] : memref<2xi32, #tpu.memory_space<smem>>
    %c0_i32 = arith.constant 0 : i32
    %c0_i32_0 = arith.constant 0 : i32
    return %1, %c0_i32, %arg0 : i32, i32, i32
  }
  func.func @transform_2(%arg0: i32, %arg1: i32, %arg2: memref<2xi32, #tpu.memory_space<smem>>) -> (i32, i32, i32) {
    %c0_i32 = arith.constant 0 : i32
    %c0_i32_0 = arith.constant 0 : i32
    return %arg1, %c0_i32, %arg0 : i32, i32, i32
  }
}

</mosaic_0001>

<llo_original>
// kernel: tpu_custom_call.1
$region0: #{tpu_custom_call.1}
  #allocation0 [shape = 'u32[]', space=smem, size = 0x4, offset = 0x4, fixed_abs, tag = 'smem constant byte address 0x4 - core index']
  #allocation1 [shape = 'u32[144,128]{1,0:T(1,128)}', space=vmem, size = 0x12000, scoped, tag = 'internal scratch']
  #allocation2 [shape = 's32[1]{0}', space=sflag, size = 0x4, scoped, tag = 'scoped memory for tpu_custom_call.1']
  #allocation3 [shape = 'u8[512]{0}', space=smem, size = 0x200, scoped, tag = 'prefetched SMEM operand 0']
  %s0 = inlined_call_operand.hbm [shape: s32[2], index: 0, kind: input, shape index: {}]
  %s1 = inlined_call_operand.hbm [shape: f32[2,48,256], index: 1, kind: input, shape index: {}]
  %s2 = inlined_call_operand.hbm [shape: f32[2,256,128], index: 2, kind: input, shape index: {}]
  %s3 = inlined_call_operand.hbm [shape: f32[2,48,128], index: 3, kind: output, shape index: {}]
  %s4 = sld [smem:[#allocation0]]
  $region49: #{tpu_custom_call.1} parent=0
    _
  %s6 = ssub.s32 1, %s4
  %s7 = scalar_select 0, %s6, %s4
  %9 = dma.hbm_to_smem %s0, 16, [#allocation3], [#allocation2]
  %10 = dma.done [#allocation2], 16
  %11 = sfence
  $region1: #{tpu_custom_call.1} parent=0
    #allocation4 [shape = 'u8[98304]{0}', space=vmem, size = 0x18000, scoped, tag = 'input window, operand 1']
    #allocation5 [shape = 's32[2]{0}', space=sflag, size = 0x8, scoped, tag = 'scoped memory for tpu_custom_call.1']
    #allocation6 [shape = 's32[2]{0}', space=sflag, size = 0x8, scoped, tag = 'scoped memory for tpu_custom_call.1']
    #allocation7 [shape = 'u8[262144]{0}', space=vmem, size = 0x40000, scoped, tag = 'input window, operand 2']
    #allocation8 [shape = 's32[2]{0}', space=sflag, size = 0x8, scoped, tag = 'scoped memory for tpu_custom_call.1']
    #allocation9 [shape = 'u8[49152]{0}', space=vmem, size = 0xc000, scoped, tag = 'output window, operand 0']
    %12 = vsyncpa [#allocation5], 0
    %s13 = scalar_lea.sflag [#allocation5], 1
    %14 = vsyncpa %s13, 0
    %15 = vsyncpa [#allocation8], 0
    %s16 = scalar_lea.sflag [#allocation8], 1
    %17 = vsyncpa %s16, 0
    %18 = vsyncpa [#allocation6], 0
    %s19 = scalar_lea.sflag [#allocation6], 1
    %20 = vsyncpa %s19, 0
    loop: start=0, step=1, limit=4
    $region2: #{tpu_custom_call.1} parent=1 // loop_pre_header
      _
    $region3: #{tpu_custom_call.1} parent=1 // loop_header
      %s22 = sphi 0, %s26
      %p23 = scmp.ge.s32.totalorder %s22, 4
      %s29 = sphi 0, %s41
      %s30 = sphi 0, %s37
      %s31 = sphi 0, %s29
      %s32 = sphi 0, %s30
      %s33 = sphi 0, %s31
      %s34 = sphi 0, %s32
      %s44 = sphi 0, %s46
      %s47 = sphi 0, %s44
      %s48 = sphi 0, %s47
      %s64 = sphi 0, %s48
      %s74 = sphi 0, %s76
      %s77 = sphi 0, %s74
      %s78 = sphi 0, %s77
      %s94 = sphi 0, %s78
      %s102 = sphi 0, %s104
      %s105 = sphi 0, %s102
      %s106 = sphi 0, %s105
      %s122 = sphi 0, %s106
    $region4: #{tpu_custom_call.1} parent=1 // loop_header_branch
      %25 = sbr.rel (%p23) target = $region8
    $region5: #{tpu_custom_call.1} parent=1 // loop_body
      %s27 = ssub.s32 %s22, 1
      %s28 = ssub.s32 %s22, 2
      %s35 = sadd.s32 1, %s30
      %p36 = scmp.ge.s32.totalorder %s35, 2
      %s37 = scalar_select %p36, 0, %s35
      %s38 = sadd.s32 1, %s29
      %s39 = scalar_select %p36, %s38, %s29
      %p40 = scmp.ge.s32.totalorder %s39, 1
      %s41 = scalar_select %p40, 0, %s39
      %s42 = ssub.s32 %s30, %s37
      %p43 = scmp.eq.s32.totalorder %s42, 0
      %s45 = sadd.s32 %s44, 1
      %s46 = scalar_select %p43, %s44, %s45
      %p49 = pneg %p43
      %p50 = scmp.eq.s32.totalorder %s22, 1
      %p51 = por %p49, %p50
      %p52 = scmp.ne.s32.totalorder %s44, %s47
      %p53 = scmp.eq.s32.totalorder %s22, 0
      %p54 = por %p52, %p53
      %p55 = scmp.ne.s32.totalorder %s44, %s47
      %p56 = scmp.eq.s32.totalorder %s27, 1
      %p57 = por %p55, %p56
      %p58 = scmp.ne.s32.totalorder %s47, %s48
      %p59 = scmp.eq.s32.totalorder %s27, 0
      %p60 = por %p58, %p59
      %p61 = scmp.ne.s32.totalorder %s47, %s48
      %p62 = scmp.eq.s32.totalorder %s28, 1
      %p63 = por %p61, %p62
      %p65 = scmp.ne.s32.totalorder %s48, %s64
      %p66 = scmp.eq.s32.totalorder %s28, 0
      %p67 = por %p65, %p66
      %s68 = sld [smem:[#allocation3 + %s30]]
      %s69 = sld [smem:[#allocation3 + %s37]]
      %s70 = ssub.s32 %s68, %s69
      %s71 = ssub.s32 %s29, %s41
      %s72 = sor.u32 %s70, %s71
      %p73 = scmp.eq.s32.totalorder %s72, 0
      %s75 = sadd.s32 %s74, 1
      %s76 = scalar_select %p73, %s74, %s75
      %p79 = pneg %p73
      %p80 = scmp.eq.s32.totalorder %s22, 1
      %p81 = por %p79, %p80
      %p82 = scmp.ne.s32.totalorder %s74, %s77
      %p83 = scmp.eq.s32.totalorder %s22, 0
      %p84 = por %p82, %p83
      %p85 = scmp.ne.s32.totalorder %s74, %s77
      %p86 = scmp.eq.s32.totalorder %s27, 1
      %p87 = por %p85, %p86
      %p88 = scmp.ne.s32.totalorder %s77, %s78
      %p89 = scmp.eq.s32.totalorder %s27, 0
      %p90 = por %p88, %p89
      %p91 = scmp.ne.s32.totalorder %s77, %s78
      %p92 = scmp.eq.s32.totalorder %s28, 1
      %p93 = por %p91, %p92
      %p95 = scmp.ne.s32.totalorder %s78, %s94
      %p96 = scmp.eq.s32.totalorder %s28, 0
      %p97 = por %p95, %p96
      %s98 = ssub.s32 %s30, %s37
      %s99 = ssub.s32 %s29, %s41
      %s100 = sor.u32 %s98, %s99
      %p101 = scmp.eq.s32.totalorder %s100, 0
      %s103 = sadd.s32 %s102, 1
      %s104 = scalar_select %p101, %s102, %s103
      %p107 = pneg %p101
      %p108 = scmp.eq.s32.totalorder %s22, 1
      %p109 = por %p107, %p108
      %p110 = scmp.ne.s32.totalorder %s102, %s105
      %p111 = scmp.eq.s32.totalorder %s22, 0
      %p112 = por %p110, %p111
      %p113 = scmp.ne.s32.totalorder %s102, %s105
      %p114 = scmp.eq.s32.totalorder %s27, 1
      %p115 = por %p113, %p114
      %p116 = scmp.ne.s32.totalorder %s105, %s106
      %p117 = scmp.eq.s32.totalorder %s27, 0
      %p118 = por %p116, %p117
      %p119 = scmp.ne.s32.totalorder %s105, %s106
      %p120 = scmp.eq.s32.totalorder %s28, 1
      %p121 = por %p119, %p120
      %p123 = scmp.ne.s32.totalorder %s106, %s122
      %p124 = scmp.eq.s32.totalorder %s28, 0
      %p125 = por %p123, %p124
      %p126 = scmp.le.s32.totalorder 1, %s22
      %p127 = scmp.lt.s32.totalorder %s22, 3
      %p128 = pnand %p126, %p127
      %p129 = pneg %p128
      // Predicated region
      $region9: #{tpu_custom_call.1} parent=5 // pred_check
        _
      $region10: #{tpu_custom_call.1} parent=5 // pred_check_branch
        %131 = sbr.rel (%p128) target = $region12
      $region11: #{tpu_custom_call.1} parent=5 // pred_region
        %s132 = ssub.s32 %s22, 1
      $region12: #{tpu_custom_call.1} parent=5 // pred_fallthru
        _
      %p133 = scmp.lt.s32.totalorder %s22, 2
      // Predicated region
      $region13: #{tpu_custom_call.1} parent=5 // pred_check
        %p134 = pneg %p133
      $region14: #{tpu_custom_call.1} parent=5 // pred_check_branch
        %136 = sbr.rel (%p134) target = $region16
      $region15: #{tpu_custom_call.1} parent=5 // pred_region
        // Predicated region
        $region17: #{tpu_custom_call.1} parent=15 // pred_check
          %p137 = pneg %p54
        $region18: #{tpu_custom_call.1} parent=15 // pred_check_branch
          %139 = sbr.rel (%p137) target = $region20
        $region19: #{tpu_custom_call.1} parent=15 // pred_region
          %s140 = sand.u32 %s44, 1
          %s141 = scalar_lea.sflag [#allocation5], %s140
          %s142 = sand.u32 %s44, 1
          %s143 = smul.addr %s142, 96
          %s144 = scalar_lea.vmem [#allocation4], %s143
          %s146 = ssub.s32 1536, 1536
          %147 = vsyncadd %s141, %s146
          %s148 = smul.addr %s30, 12
          %s149 = smul.addr %s148, 128
          %s150 = scalar_lea.hbm %s1, %s149
          %s151 = sshll.u32 %s144, 4
          %s152 = int_to_ptr.vmem [resolvable:$true] %s151
          %157 = dma.hbm_to_vmem [thread:$0]  %s150, 1536, %s152, %s141, 256, 256, 16
        $region20: #{tpu_custom_call.1} parent=15 // pred_fallthru
          _
        // Predicated region
        $region21: #{tpu_custom_call.1} parent=15 // pred_check
          %p158 = pneg %p84
        $region22: #{tpu_custom_call.1} parent=15 // pred_check_branch
          %160 = sbr.rel (%p158) target = $region24
        $region23: #{tpu_custom_call.1} parent=15 // pred_region
          %s161 = sand.u32 %s74, 1
          %s162 = scalar_lea.sflag [#allocation8], %s161
          %s163 = sand.u32 %s74, 1
          %s164 = smul.addr %s163, 256
          %s165 = scalar_lea.vmem [#allocation7], %s164
          %s166 = sld [smem:[#allocation3 + %s30]]
          %s168 = ssub.s32 4096, 4096
          %169 = vsyncadd %s162, %s168
          %s170 = smul.addr %s166, 32
          %s171 = sadd.s32 %s29, %s170
          %s172 = smul.addr %s171, 128
          %s173 = scalar_lea.hbm %s2, %s172
          %s174 = sshll.u32 %s165, 4
          %s175 = int_to_ptr.vmem [resolvable:$true] %s174
          %180 = dma.hbm_to_vmem [thread:$0]  %s173, 4096, %s175, %s162, 128, 128, 8
        $region24: #{tpu_custom_call.1} parent=15 // pred_fallthru
          _
      $region16: #{tpu_custom_call.1} parent=5 // pred_fallthru
        _
      %p181 = scmp.le.s32.totalorder 1, %s22
      %p182 = scmp.lt.s32.totalorder %s22, 3
      %p183 = pnand %p181, %p182
      %p184 = pneg %p183
      // Predicated region
      $region25: #{tpu_custom_call.1} parent=5 // pred_check
        _
      $region26: #{tpu_custom_call.1} parent=5 // pred_check_branch
        %186 = sbr.rel (%p183) target = $region28
      $region27: #{tpu_custom_call.1} parent=5 // pred_region
        %s187 = ssub.s32 %s22, 1
        %s188 = sand.u32 %s47, 1
        %s189 = scalar_lea.sflag [#allocation5], %s188
        %s190 = sand.u32 %s47, 1
        %s191 = smul.addr %s190, 96
        %s192 = scalar_lea.vmem [#allocation4], %s191
        // Predicated region
        $region29: #{tpu_custom_call.1} parent=27 // pred_check
          %p193 = pneg %p60
        $region30: #{tpu_custom_call.1} parent=27 // pred_check_branch
          %195 = sbr.rel (%p193) target = $region32
        $region31: #{tpu_custom_call.1} parent=27 // pred_region
          %196 = dma.done %s189, 1536
        $region32: #{tpu_custom_call.1} parent=27 // pred_fallthru
          _
        %s197 = sand.u32 %s77, 1
        %s198 = scalar_lea.sflag [#allocation8], %s197
        %s199 = sand.u32 %s77, 1
        %s200 = smul.addr %s199, 256
        %s201 = scalar_lea.vmem [#allocation7], %s200
        // Predicated region
        $region33: #{tpu_custom_call.1} parent=27 // pred_check
          %p202 = pneg %p90
        $region34: #{tpu_custom_call.1} parent=27 // pred_check_branch
          %204 = sbr.rel (%p202) target = $region36
        $region35: #{tpu_custom_call.1} parent=27 // pred_region
          %205 = dma.done %s198, 4096
        $region36: #{tpu_custom_call.1} parent=27 // pred_fallthru
          _
        %s206 = sand.u32 %s47, 1
        %s207 = scalar_lea.sflag [#allocation5], %s206
        %s208 = sand.u32 %s47, 1
        %s209 = smul.addr %s208, 96
        %s210 = scalar_lea.vmem [#allocation4], %s209
        %p211 = pneg %p60
        %p212 = pneg %p57
        %s213 = sand.u32 %s77, 1
        %s214 = scalar_lea.sflag [#allocation8], %s213
        %s215 = sand.u32 %s77, 1
        %s216 = smul.addr %s215, 256
        %s217 = scalar_lea.vmem [#allocation7], %s216
        %p218 = pneg %p90
        %p219 = pneg %p87
        %p220 = pneg %p118
        %p221 = pneg %p115
        %s222 = sand.u32 %s105, 1
        %s223 = scalar_lea.sflag [#allocation6], %s222
        %s224 = sand.u32 %s105, 1
        %s225 = smul.addr %s224, 48
        %s226 = scalar_lea.vmem [#allocation9], %s225
        %s227 = sld [smem:[#allocation3 + %s32]]
        %v228 = vld [vmem:[%s192] sm:$0xff]
        %v229 = vld [vmem:[%s192 + $0x8] sm:$0xff]
        %v230 = vld [vmem:[%s192 + $0x10] sm:$0xff]
        %v231 = vld [vmem:[%s192 + $0x18] sm:$0xff]
        %v232 = vld [vmem:[%s192 + $0x20] sm:$0xff]
        %v233 = vld [vmem:[%s192 + $0x28] sm:$0xff]
        %v234 = vld [vmem:[%s192 + $0x30] sm:$0xff]
        %v235 = vld [vmem:[%s192 + $0x38] sm:$0xff]
        %v236 = vld [vmem:[%s192 + $0x40] sm:$0xff]
        %v237 = vld [vmem:[%s192 + $0x48] sm:$0xff]
        %v238 = vld [vmem:[%s192 + $0x50] sm:$0xff]
        %v239 = vld [vmem:[%s192 + $0x58] sm:$0xff]
        %v240 = vld [vmem:[%s201] sm:$0xff]
        %v241 = vld [vmem:[%s201 + $0x8] sm:$0xff]
        %v242 = vld [vmem:[%s201 + $0x10] sm:$0xff]
        %v243 = vld [vmem:[%s201 + $0x18] sm:$0xff]
        %v244 = vld [vmem:[%s201 + $0x20] sm:$0xff]
        %v245 = vld [vmem:[%s201 + $0x28] sm:$0xff]
        %v246 = vld [vmem:[%s201 + $0x30] sm:$0xff]
        %v247 = vld [vmem:[%s201 + $0x38] sm:$0xff]
        %v248 = vld [vmem:[%s201 + $0x40] sm:$0xff]
        %v249 = vld [vmem:[%s201 + $0x48] sm:$0xff]
        %v250 = vld [vmem:[%s201 + $0x50] sm:$0xff]
        %v251 = vld [vmem:[%s201 + $0x58] sm:$0xff]
        %v252 = vld [vmem:[%s201 + $0x60] sm:$0xff]
        %v253 = vld [vmem:[%s201 + $0x68] sm:$0xff]
        %v254 = vld [vmem:[%s201 + $0x70] sm:$0xff]
        %v255 = vld [vmem:[%s201 + $0x78] sm:$0xff]
        %v256 = vld [vmem:[%s201 + $0x80] sm:$0xff]
        %v257 = vld [vmem:[%s201 + $0x88] sm:$0xff]
        %v258 = vld [vmem:[%s201 + $0x90] sm:$0xff]
        %v259 = vld [vmem:[%s201 + $0x98] sm:$0xff]
        %v260 = vld [vmem:[%s201 + $0xa0] sm:$0xff]
        %v261 = vld [vmem:[%s201 + $0xa8] sm:$0xff]
        %v262 = vld [vmem:[%s201 + $0xb0] sm:$0xff]
        %v263 = vld [vmem:[%s201 + $0xb8] sm:$0xff]
        %v264 = vld [vmem:[%s201 + $0xc0] sm:$0xff]
        %v265 = vld [vmem:[%s201 + $0xc8] sm:$0xff]
        %v266 = vld [vmem:[%s201 + $0xd0] sm:$0xff]
        %v267 = vld [vmem:[%s201 + $0xd8] sm:$0xff]
        %v268 = vld [vmem:[%s201 + $0xe0] sm:$0xff]
        %v269 = vld [vmem:[%s201 + $0xe8] sm:$0xff]
        %v270 = vld [vmem:[%s201 + $0xf0] sm:$0xff]
        %v271 = vld [vmem:[%s201 + $0xf8] sm:$0xff]
        %272 = vmatprep.subr.mxu0 0.0
        %273 = vmatpush1.msra.mxu0 %v240
        %274 = vmatprep.subr.mxu0 0.0
        %275 = vmatpush1.msra.mxu0 %v241
        %276 = vmatprep.subr.mxu0 0.0
        %277 = vmatpush1.msra.mxu0 %v242
        %278 = vmatprep.subr.mxu0 0.0
        %279 = vmatpush1.msra.mxu0 %v243
        %280 = vmatprep.subr.mxu0 0.0
        %281 = vmatpush1.msra.mxu0 %v244
        %282 = vmatprep.subr.mxu0 0.0
        %283 = vmatpush1.msra.mxu0 %v245
        %284 = vmatprep.subr.mxu0 0.0
        %285 = vmatpush1.msra.mxu0 %v246
        %286 = vmatprep.subr.mxu0 0.0
        %287 = vmatpush1.msra.mxu0 %v247
        %288 = vmatprep.subr.mxu0 0.0
        %289 = vmatpush1.msra.mxu0 %v248
        %290 = vmatprep.subr.mxu0 0.0
        %291 = vmatpush1.msra.mxu0 %v249
        %292 = vmatprep.subr.mxu0 0.0
        %293 = vmatpush1.msra.mxu0 %v250
        %294 = vmatprep.subr.mxu0 0.0
        %295 = vmatpush1.msra.mxu0 %v251
        %296 = vmatprep.subr.mxu0 0.0
        %297 = vmatpush1.msra.mxu0 %v252
        %298 = vmatprep.subr.mxu0 0.0
        %299 = vmatpush1.msra.mxu0 %v253
        %300 = vmatprep.subr.mxu0 0.0
        %301 = vmatpush1.msra.mxu0 %v254
        %302 = vmatprep.subr.mxu0 0.0
        %303 = vmatpush1.msra.mxu0 %v255
        %304 = vmatprep.subr.mxu0 0.0
        %305 = vmatpush1.msra.mxu0 %v256
        %306 = vmatprep.subr.mxu0 0.0
        %307 = vmatpush1.msra.mxu0 %v257
        %308 = vmatprep.subr.mxu0 0.0
        %309 = vmatpush1.msra.mxu0 %v258
        %310 = vmatprep.subr.mxu0 0.0
        %311 = vmatpush1.msra.mxu0 %v259
        %312 = vmatprep.subr.mxu0 0.0
        %313 = vmatpush1.msra.mxu0 %v260
        %314 = vmatprep.subr.mxu0 0.0
        %315 = vmatpush1.msra.mxu0 %v261
        %316 = vmatprep.subr.mxu0 0.0
        %317 = vmatpush1.msra.mxu0 %v262
        %318 = vmatprep.subr.mxu0 0.0
        %319 = vmatpush1.msra.mxu0 %v263
        %320 = vmatprep.subr.mxu0 0.0
        %321 = vmatpush1.msra.mxu0 %v264
        %322 = vmatprep.subr.mxu0 0.0
        %323 = vmatpush1.msra.mxu0 %v265
        %324 = vmatprep.subr.mxu0 0.0
        %325 = vmatpush1.msra.mxu0 %v266
        %326 = vmatprep.subr.mxu0 0.0
        %327 = vmatpush1.msra.mxu0 %v267
        %328 = vmatprep.subr.mxu0 0.0
        %329 = vmatpush1.msra.mxu0 %v268
        %330 = vmatprep.subr.mxu0 0.0
        %331 = vmatpush1.msra.mxu0 %v269
        %332 = vmatprep.subr.mxu0 0.0
        %333 = vmatpush1.msra.mxu0 %v270
        %334 = vmatprep.subr.mxu0 0.0
        %335 = vmatpush1.msra.mxu0 %v271
        %336 = vmatprep.mubr.f32.mxu0 %v229
        %337 = vmatmul.mubr.f32.gmra.mrb[0].mxu0 %v228
        %v338 = vpop.f32.mrb[0].mxu0
        %v339 = vadd.f32 0.0, %v338
        %v340 = vpop.f32.mrb[0].mxu0
        %341 = vmatprep.mubr.f32.mxu0 %v231
        %342 = vmatmul.mubr.f32.gmra.mrb[0].mxu0 %v230
        %v343 = vpop.f32.mrb[0].mxu0
        %v344 = vadd.f32 0.0, %v343
        %v345 = vpop.f32.mrb[0].mxu0
        %346 = vmatprep.mubr.f32.mxu0 %v233
        %347 = vmatmul.mubr.f32.gmra.mrb[0].mxu0 %v232
        %v348 = vpop.f32.mrb[0].mxu0
        %v349 = vadd.f32 0.0, %v348
        %v350 = vpop.f32.mrb[0].mxu0
        %351 = vmatprep.mubr.f32.mxu0 %v235
        %352 = vmatmul.mubr.f32.gmra.mrb[0].mxu0 %v234
        %v353 = vpop.f32.mrb[0].mxu0
        %v354 = vadd.f32 0.0, %v353
        %v355 = vpop.f32.mrb[0].mxu0
        %356 = vmatprep.mubr.f32.mxu0 %v237
        %357 = vmatmul.mubr.f32.gmra.mrb[0].mxu0 %v236
        %v358 = vpop.f32.mrb[0].mxu0
        %v359 = vadd.f32 0.0, %v358
        %v360 = vpop.f32.mrb[0].mxu0
        %361 = vmatprep.mubr.f32.mxu0 %v239
        %362 = vmatmul.mubr.f32.gmra.mrb[0].mxu0 %v238
        %v363 = vpop.f32.mrb[0].mxu0
        %v364 = vadd.f32 0.0, %v363
        %v365 = vpop.f32.mrb[0].mxu0
        %366 = vdwg.mxu0
        %367 = vst [vmem:[%s226] sm:$0xff] %v339
        %368 = vst [vmem:[%s226 + $0x8] sm:$0xff] %v344
        %369 = vst [vmem:[%s226 + $0x10] sm:$0xff] %v349
        %370 = vst [vmem:[%s226 + $0x18] sm:$0xff] %v354
        %371 = vst [vmem:[%s226 + $0x20] sm:$0xff] %v359
        %372 = vst [vmem:[%s226 + $0x28] sm:$0xff] %v364
        %s373 = sand.u32 %s105, 1
        %s374 = scalar_lea.sflag [#allocation6], %s373
        %s375 = sand.u32 %s105, 1
        %s376 = smul.addr %s375, 48
        %s377 = scalar_lea.vmem [#allocation9], %s376
        // Predicated region
        $region37: #{tpu_custom_call.1} parent=27 // pred_check
          %p378 = pneg %p115
        $region38: #{tpu_custom_call.1} parent=27 // pred_check_branch
          %380 = sbr.rel (%p378) target = $region40
        $region39: #{tpu_custom_call.1} parent=27 // pred_region
          %s382 = ssub.s32 768, 768
          %383 = vsyncadd %s374, %s382
          %s384 = smul.addr %s32, 6
          %s385 = sadd.s32 %s31, %s384
          %s386 = smul.addr %s385, 128
          %s387 = scalar_lea.hbm %s3, %s386
          %s388 = sshll.u32 %s377, 4
          %s389 = int_to_ptr.vmem [resolvable:$true] %s388
          %394 = dma.vmem_to_hbm [thread:$0]  %s389, 768, %s387, %s374, 128, 128, 8
        $region40: #{tpu_custom_call.1} parent=27 // pred_fallthru
          _
      $region28: #{tpu_custom_call.1} parent=5 // pred_fallthru
        _
      %p395 = scmp.le.s32.totalorder 2, %s22
      // Predicated region
      $region41: #{tpu_custom_call.1} parent=5 // pred_check
        %p396 = pneg %p395
      $region42: #{tpu_custom_call.1} parent=5 // pred_check_branch
        %398 = sbr.rel (%p396) target = $region44
      $region43: #{tpu_custom_call.1} parent=5 // pred_region
        %s399 = ssub.s32 %s22, 2
        // Predicated region
        $region45: #{tpu_custom_call.1} parent=43 // pred_check
          %p400 = pneg %p121
        $region46: #{tpu_custom_call.1} parent=43 // pred_check_branch
          %402 = sbr.rel (%p400) target = $region48
        $region47: #{tpu_custom_call.1} parent=43 // pred_region
          %s403 = sand.u32 %s106, 1
          %s404 = scalar_lea.sflag [#allocation6], %s403
          %s405 = sand.u32 %s106, 1
          %s406 = smul.addr %s405, 48
          %s407 = scalar_lea.vmem [#allocation9], %s406
          %408 = dma.done %s404, 768
        $region48: #{tpu_custom_call.1} parent=43 // pred_fallthru
          _
      $region44: #{tpu_custom_call.1} parent=5 // pred_fallthru
        _
    $region6: #{tpu_custom_call.1} parent=1 // loop_footer
      %s26 = sadd.s32 1, %s22
    $region7: #{tpu_custom_call.1} parent=1 // loop_footer_branch
      %21 = sbr.rel target = $region3
    $region8: #{tpu_custom_call.1} parent=1 // loop_exit
      _
    %409 = vsyncpa [#allocation5], 1
    %s410 = scalar_lea.sflag [#allocation5], 1
    %411 = vsyncpa %s410, 1
    %412 = vsyncpa [#allocation8], 1
    %s413 = scalar_lea.sflag [#allocation8], 1
    %414 = vsyncpa %s413, 1
    %415 = vsyncpa [#allocation6], 1
    %s416 = scalar_lea.sflag [#allocation6], 1
    %417 = vsyncpa %s416, 1

</llo_original>
